<compile_context>
chip_gen: v6e
topology: v6e:2x2x1
jax: 0.10.0
libtpu: 0.0.40
codegen_flags: <defaults>
</compile_context>

<pallas_src>
import functools

import jax
import jax.numpy as jnp
from jax.experimental import pallas as pl
from jax.experimental.pallas import tpu as pltpu


# ----------------------------------------------------------------------------
# Fused (x @ w + b) [+ ReLU] kernel: one grid step, whole operands in VMEM.
# ----------------------------------------------------------------------------
def _fused_linear_kernel(x_ref, w_ref, b_ref, o_ref, *, apply_relu):
    # Single phase: full-depth dot, bias add, optional ReLU.  No scratch, no
    # init/finalize pl.when phases (K and N fit in one block for every layer).
    y = jnp.dot(x_ref[...], w_ref[...], preferred_element_type=jnp.float32)
    y = y + b_ref[...]                      # (1, N) bias broadcasts over rows
    if apply_relu:
        y = jnp.maximum(y, 0.0)
    o_ref[...] = y.astype(o_ref.dtype)


def fused_linear(x, w, b, *, apply_relu):
    """y = x @ w + b (optionally ReLU).  x: (M, K), w: (K, N), b: (N,).

    Single-block pallas_call: all operands are whole-array VMEM blocks.
    # TODO(synk): for large M this should tile the row axis (cap tm); not needed
    # for CNN_3D-sized problems (M <= a few hundred here).
    """
    M, K = x.shape
    K2, N = w.shape
    assert K == K2 and b.shape == (N,), (x.shape, w.shape, b.shape)
    b2 = b.reshape(1, N).astype(jnp.float32)

    kernel = functools.partial(_fused_linear_kernel, apply_relu=apply_relu)
    return pl.pallas_call(
        kernel,
        out_shape=jax.ShapeDtypeStruct((M, N), jnp.float32),
        grid=(1,),
        in_specs=[
            pl.BlockSpec((M, K), lambda i: (0, 0)),
            pl.BlockSpec((K, N), lambda i: (0, 0)),
            pl.BlockSpec((1, N), lambda i: (0, 0)),
        ],
        out_specs=pl.BlockSpec((M, N), lambda i: (0, 0)),
        compiler_params=pltpu.CompilerParams(
            dimension_semantics=("arbitrary",)
        ),
    )(x.astype(jnp.float32), w.astype(jnp.float32), b2)


# ----------------------------------------------------------------------------
# Conv3d (stride 1) as im2col + fused Pallas matmul, matching PyTorch semantics.
# ----------------------------------------------------------------------------
def _im2col_3d(x, ksize, padding):
    """x: (B, Cin, D, H, W) -> (B*Do*Ho*Wo, Cin*kD*kH*kW).

    Column order matches PyTorch weight.reshape(Cout, -1): ci-major, then kd, kh, kw.
    """
    B, Cin, D, H, W = x.shape
    kD, kH, kW = ksize
    pD, pH, pW = padding
    xp = jnp.pad(x, ((0, 0), (0, 0), (pD, pD), (pH, pH), (pW, pW)))
    Do = D + 2 * pD - kD + 1
    Ho = H + 2 * pH - kH + 1
    Wo = W + 2 * pW - kW + 1
    taps = []
    for kd in range(kD):
        for kh in range(kH):
            for kw in range(kW):
                taps.append(xp[:, :, kd:kd + Do, kh:kh + Ho, kw:kw + Wo])
    patches = jnp.stack(taps, axis=2)                 # (B, Cin, T, Do, Ho, Wo)
    patches = patches.transpose(0, 3, 4, 5, 1, 2)     # (B, Do, Ho, Wo, Cin, T)
    return patches.reshape(B * Do * Ho * Wo, Cin * kD * kH * kW), (Do, Ho, Wo)


def conv3d(x, w, b, padding, *, apply_relu):
    """x: (B, Cin, D, H, W); w: (Cout, Cin, kD, kH, kW); b: (Cout,)."""
    B = x.shape[0]
    Cout, Cin, kD, kH, kW = w.shape
    patches, (Do, Ho, Wo) = _im2col_3d(x, (kD, kH, kW), padding)
    w_mat = w.reshape(Cout, Cin * kD * kH * kW).T          # (K, Cout)
    y = fused_linear(patches, w_mat, b, apply_relu=apply_relu)  # (B*Do*Ho*Wo, Cout)
    return y.reshape(B, Do, Ho, Wo, Cout).transpose(0, 4, 1, 2, 3)


# ----------------------------------------------------------------------------
# CNN_3D forward
# ----------------------------------------------------------------------------
def cnn3d_forward(x, params):
    """Matches CNN_3D.forward: relu(conv1) -> relu(conv2) -> flatten -> fc."""
    (w1, b1), (w2, b2), (wf, bf) = params
    x = conv3d(x, w1, b1, padding=(1, 0, 0), apply_relu=True)
    x = conv3d(x, w2, b2, padding=(1, 0, 0), apply_relu=True)
    feats = x.reshape(x.shape[0], -1)   # same (C, D, H, W) row-major order as torch.view
    # TODO(synk): conv2 + fc could be fused into one kernel by permuting the fc weight
    # rows; kept separate to avoid an in-kernel cross-row reshape on tiny unaligned shapes.
    return fused_linear(feats, wf, bf, apply_relu=False)


def init_cnn3d_params(key, input_channels, num_classes, n_planes=2, patch_size=5):
    """Xavier-uniform weights (as in CNN_3D.weight_init), small random biases."""
    def xavier(k, shape, fan_in, fan_out):
        bound = (6.0 / (fan_in + fan_out)) ** 0.5
        return jax.random.uniform(k, shape, jnp.float32, -bound, bound)

    k1, k2, k3, k4, k5, k6 = jax.random.split(key, 6)
    # conv1: (n_planes, 1, 7, 3, 3)
    w1 = xavier(k1, (n_planes, 1, 7, 3, 3), 1 * 63, n_planes * 63)
    b1 = 0.1 * jax.random.normal(k4, (n_planes,), jnp.float32)
    # conv2: (2*n_planes, n_planes, 3, 3, 3)
    w2 = xavier(k2, (2 * n_planes, n_planes, 3, 3, 3), n_planes * 27, 2 * n_planes * 27)
    b2 = 0.1 * jax.random.normal(k5, (2 * n_planes,), jnp.float32)
    # flattened feature size after both convs
    d1 = input_channels + 2 - 7 + 1
    h1 = patch_size - 3 + 1
    d2 = d1 + 2 - 3 + 1
    h2 = h1 - 3 + 1
    features = 2 * n_planes * d2 * h2 * h2
    wf = xavier(k3, (features, num_classes), features, num_classes)  # stored as torch weight.T
    bf = 0.1 * jax.random.normal(k6, (num_classes,), jnp.float32)
    return [(w1, b1), (w2, b2), (wf, bf)], features


if __name__ == "__main__":
    batch = 2
    input_channels = 16
    num_classes = 10
    n_planes = 2
    patch_size = 5

    key = jax.random.PRNGKey(0)
    kx, kp = jax.random.split(key)
    x = jax.random.normal(
        kx, (batch, 1, input_channels, patch_size, patch_size), dtype=jnp.float32)
    params, features = init_cnn3d_params(kp, input_channels, num_classes,
                                         n_planes, patch_size)

    out = jax.jit(cnn3d_forward)(x, params)
    out = jax.block_until_ready(out)

    # Pure-JAX reference (lax conv matches PyTorch Conv3d NCDHW/OIDHW semantics).
    def ref_forward(x, params):
        (w1, b1), (w2, b2), (wf, bf) = params
        hi = jax.lax.Precision.HIGHEST
        y = jax.lax.conv_general_dilated(
            x, w1, (1, 1, 1), [(1, 1), (0, 0), (0, 0)],
            dimension_numbers=("NCDHW", "OIDHW", "NCDHW"), precision=hi)
        y = jnp.maximum(y + b1.reshape(1, -1, 1, 1, 1), 0.0)
        y = jax.lax.conv_general_dilated(
            y, w2, (1, 1, 1), [(1, 1), (0, 0), (0, 0)],
            dimension_numbers=("NCDHW", "OIDHW", "NCDHW"), precision=hi)
        y = jnp.maximum(y + b2.reshape(1, -1, 1, 1, 1), 0.0)
        feats = y.reshape(y.shape[0], -1)
        return jnp.dot(feats, wf, precision=hi) + bf

    ref = ref_forward(x, params)
    assert out.shape == (batch, num_classes), out.shape
    assert params[2][0].shape[0] == features
    assert jnp.allclose(out, ref, atol=1e-3, rtol=1e-3), float(jnp.max(jnp.abs(out - ref)))

    print("KERNEL_OK")
</pallas_src>

<mosaic_0001>
module attributes {stable_mosaic.version = 11 : i64} {
  func.func @_fused_linear_kernel(%arg0: i32, %arg1: memref<216x63xf32, #tpu.memory_space<vmem>>, %arg2: memref<63x2xf32, #tpu.memory_space<vmem>>, %arg3: memref<1x2xf32, #tpu.memory_space<vmem>>, %arg4: memref<216x2xf32, #tpu.memory_space<vmem>>) attributes {dimension_semantics = [#tpu.dimension_semantics<arbitrary>], iteration_bounds = array<i64: 1>, scalar_prefetch = 0 : i64, scratch_operands = 0 : i64, tpu.core_type = #tpu.core_type<tc>, window_params = [{pipeline_mode = #tpu.pipeline_mode<synchronous>, transform_indices = @transform_0, window_bounds = array<i64: 216, 63>}, {pipeline_mode = #tpu.pipeline_mode<synchronous>, transform_indices = @transform_1, window_bounds = array<i64: 63, 2>}, {pipeline_mode = #tpu.pipeline_mode<synchronous>, transform_indices = @transform_2, window_bounds = array<i64: 1, 2>}, {pipeline_mode = #tpu.pipeline_mode<synchronous>, transform_indices = @transform_3, window_bounds = array<i64: 216, 2>}]} {
    %c0 = arith.constant 0 : index
    %c0_0 = arith.constant 0 : index
    %0 = vector.load %arg1[%c0, %c0_0] : memref<216x63xf32, #tpu.memory_space<vmem>>, vector<216x63xf32>
    %c0_1 = arith.constant 0 : index
    %c0_2 = arith.constant 0 : index
    %1 = vector.load %arg2[%c0_1, %c0_2] : memref<63x2xf32, #tpu.memory_space<vmem>>, vector<63x2xf32>
    %cst = arith.constant dense<0.000000e+00> : vector<216x2xf32>
    %2 = tpu.matmul %0, %1, %cst {dimension_numbers = #tpu.dot_dimension_numbers<[1], [0], [0], [1], [0, 0, 1, 1], [], []>} : vector<216x63xf32>, vector<63x2xf32>, vector<216x2xf32> -> vector<216x2xf32>
    %c0_3 = arith.constant 0 : index
    %c0_4 = arith.constant 0 : index
    %3 = vector.load %arg3[%c0_3, %c0_4] : memref<1x2xf32, #tpu.memory_space<vmem>>, vector<1x2xf32>
    %4 = vector.broadcast %3 : vector<1x2xf32> to vector<216x2xf32>
    %5 = arith.addf %2, %4 : vector<216x2xf32>
    %cst_5 = arith.constant 0.000000e+00 : f32
    %6 = vector.broadcast %cst_5 : f32 to vector<216x2xf32>
    %7 = arith.maximumf %5, %6 : vector<216x2xf32>
    %c0_6 = arith.constant 0 : index
    %c0_7 = arith.constant 0 : index
    %8 = vector.load %arg4[%c0_6, %c0_7] : memref<216x2xf32, #tpu.memory_space<vmem>>, vector<216x2xf32>
    tpu.vector_store %arg4[%c0_6, %c0_7], %7 {strides = array<i32>} : memref<216x2xf32, #tpu.memory_space<vmem>>, vector<216x2xf32>,
    return
  }
  func.func @transform_0(%arg0: i32) -> (i32, i32) {
    %c0_i32 = arith.constant 0 : i32
    %c0_i32_0 = arith.constant 0 : i32
    %c0_i32_1 = arith.constant 0 : i32
    return %c0_i32, %c0_i32_0 : i32, i32
  }
  func.func @transform_1(%arg0: i32) -> (i32, i32) {
    %c0_i32 = arith.constant 0 : i32
    %c0_i32_0 = arith.constant 0 : i32
    %c0_i32_1 = arith.constant 0 : i32
    return %c0_i32, %c0_i32_0 : i32, i32
  }
  func.func @transform_2(%arg0: i32) -> (i32, i32) {
    %c0_i32 = arith.constant 0 : i32
    %c0_i32_0 = arith.constant 0 : i32
    %c0_i32_1 = arith.constant 0 : i32
    return %c0_i32, %c0_i32_0 : i32, i32
  }
  func.func @transform_3(%arg0: i32) -> (i32, i32) {
    %c0_i32 = arith.constant 0 : i32
    %c0_i32_0 = arith.constant 0 : i32
    %c0_i32_1 = arith.constant 0 : i32
    return %c0_i32, %c0_i32_0 : i32, i32
  }
}

module attributes {stable_mosaic.version = 11 : i64} {
  func.func @_fused_linear_kernel(%arg0: i32, %arg1: memref<24x54xf32, #tpu.memory_space<vmem>>, %arg2: memref<54x4xf32, #tpu.memory_space<vmem>>, %arg3: memref<1x4xf32, #tpu.memory_space<vmem>>, %arg4: memref<24x4xf32, #tpu.memory_space<vmem>>) attributes {dimension_semantics = [#tpu.dimension_semantics<arbitrary>], iteration_bounds = array<i64: 1>, scalar_prefetch = 0 : i64, scratch_operands = 0 : i64, tpu.core_type = #tpu.core_type<tc>, window_params = [{pipeline_mode = #tpu.pipeline_mode<synchronous>, transform_indices = @transform_0, window_bounds = array<i64: 24, 54>}, {pipeline_mode = #tpu.pipeline_mode<synchronous>, transform_indices = @transform_1, window_bounds = array<i64: 54, 4>}, {pipeline_mode = #tpu.pipeline_mode<synchronous>, transform_indices = @transform_2, window_bounds = array<i64: 1, 4>}, {pipeline_mode = #tpu.pipeline_mode<synchronous>, transform_indices = @transform_3, window_bounds = array<i64: 24, 4>}]} {
    %c0 = arith.constant 0 : index
    %c0_0 = arith.constant 0 : index
    %0 = vector.load %arg1[%c0, %c0_0] : memref<24x54xf32, #tpu.memory_space<vmem>>, vector<24x54xf32>
    %c0_1 = arith.constant 0 : index
    %c0_2 = arith.constant 0 : index
    %1 = vector.load %arg2[%c0_1, %c0_2] : memref<54x4xf32, #tpu.memory_space<vmem>>, vector<54x4xf32>
    %cst = arith.constant dense<0.000000e+00> : vector<24x4xf32>
    %2 = tpu.matmul %0, %1, %cst {dimension_numbers = #tpu.dot_dimension_numbers<[1], [0], [0], [1], [0, 0, 1, 1], [], []>} : vector<24x54xf32>, vector<54x4xf32>, vector<24x4xf32> -> vector<24x4xf32>
    %c0_3 = arith.constant 0 : index
    %c0_4 = arith.constant 0 : index
    %3 = vector.load %arg3[%c0_3, %c0_4] : memref<1x4xf32, #tpu.memory_space<vmem>>, vector<1x4xf32>
    %4 = vector.broadcast %3 : vector<1x4xf32> to vector<24x4xf32>
    %5 = arith.addf %2, %4 : vector<24x4xf32>
    %cst_5 = arith.constant 0.000000e+00 : f32
    %6 = vector.broadcast %cst_5 : f32 to vector<24x4xf32>
    %7 = arith.maximumf %5, %6 : vector<24x4xf32>
    %c0_6 = arith.constant 0 : index
    %c0_7 = arith.constant 0 : index
    %8 = vector.load %arg4[%c0_6, %c0_7] : memref<24x4xf32, #tpu.memory_space<vmem>>, vector<24x4xf32>
    tpu.vector_store %arg4[%c0_6, %c0_7], %7 {strides = array<i32>} : memref<24x4xf32, #tpu.memory_space<vmem>>, vector<24x4xf32>,
    return
  }
  func.func @transform_0(%arg0: i32) -> (i32, i32) {
    %c0_i32 = arith.constant 0 : i32
    %c0_i32_0 = arith.constant 0 : i32
    %c0_i32_1 = arith.constant 0 : i32
    return %c0_i32, %c0_i32_0 : i32, i32
  }
  func.func @transform_1(%arg0: i32) -> (i32, i32) {
    %c0_i32 = arith.constant 0 : i32
    %c0_i32_0 = arith.constant 0 : i32
    %c0_i32_1 = arith.constant 0 : i32
    return %c0_i32, %c0_i32_0 : i32, i32
  }
  func.func @transform_2(%arg0: i32) -> (i32, i32) {
    %c0_i32 = arith.constant 0 : i32
    %c0_i32_0 = arith.constant 0 : i32
    %c0_i32_1 = arith.constant 0 : i32
    return %c0_i32, %c0_i32_0 : i32, i32
  }
  func.func @transform_3(%arg0: i32) -> (i32, i32) {
    %c0_i32 = arith.constant 0 : i32
    %c0_i32_0 = arith.constant 0 : i32
    %c0_i32_1 = arith.constant 0 : i32
    return %c0_i32, %c0_i32_0 : i32, i32
  }
}

module attributes {stable_mosaic.version = 11 : i64} {
  func.func @_fused_linear_kernel(%arg0: i32, %arg1: memref<2x48xf32, #tpu.memory_space<vmem>>, %arg2: memref<48x10xf32, #tpu.memory_space<vmem>>, %arg3: memref<1x10xf32, #tpu.memory_space<vmem>>, %arg4: memref<2x10xf32, #tpu.memory_space<vmem>>) attributes {dimension_semantics = [#tpu.dimension_semantics<arbitrary>], iteration_bounds = array<i64: 1>, scalar_prefetch = 0 : i64, scratch_operands = 0 : i64, tpu.core_type = #tpu.core_type<tc>, window_params = [{pipeline_mode = #tpu.pipeline_mode<synchronous>, transform_indices = @transform_0, window_bounds = array<i64: 2, 48>}, {pipeline_mode = #tpu.pipeline_mode<synchronous>, transform_indices = @transform_1, window_bounds = array<i64: 48, 10>}, {pipeline_mode = #tpu.pipeline_mode<synchronous>, transform_indices = @transform_2, window_bounds = array<i64: 1, 10>}, {pipeline_mode = #tpu.pipeline_mode<synchronous>, transform_indices = @transform_3, window_bounds = array<i64: 2, 10>}]} {
    %c0 = arith.constant 0 : index
    %c0_0 = arith.constant 0 : index
    %0 = vector.load %arg1[%c0, %c0_0] : memref<2x48xf32, #tpu.memory_space<vmem>>, vector<2x48xf32>
    %c0_1 = arith.constant 0 : index
    %c0_2 = arith.constant 0 : index
    %1 = vector.load %arg2[%c0_1, %c0_2] : memref<48x10xf32, #tpu.memory_space<vmem>>, vector<48x10xf32>
    %cst = arith.constant dense<0.000000e+00> : vector<2x10xf32>
    %2 = tpu.matmul %0, %1, %cst {dimension_numbers = #tpu.dot_dimension_numbers<[1], [0], [0], [1], [0, 0, 1, 1], [], []>} : vector<2x48xf32>, vector<48x10xf32>, vector<2x10xf32> -> vector<2x10xf32>
    %c0_3 = arith.constant 0 : index
    %c0_4 = arith.constant 0 : index
    %3 = vector.load %arg3[%c0_3, %c0_4] : memref<1x10xf32, #tpu.memory_space<vmem>>, vector<1x10xf32>
    %4 = vector.broadcast %3 : vector<1x10xf32> to vector<2x10xf32>
    %5 = arith.addf %2, %4 : vector<2x10xf32>
    %c0_5 = arith.constant 0 : index
    %c0_6 = arith.constant 0 : index
    %6 = vector.load %arg4[%c0_5, %c0_6] : memref<2x10xf32, #tpu.memory_space<vmem>>, vector<2x10xf32>
    tpu.vector_store %arg4[%c0_5, %c0_6], %5 {strides = array<i32>} : memref<2x10xf32, #tpu.memory_space<vmem>>, vector<2x10xf32>,
    return
  }
  func.func @transform_0(%arg0: i32) -> (i32, i32) {
    %c0_i32 = arith.constant 0 : i32
    %c0_i32_0 = arith.constant 0 : i32
    %c0_i32_1 = arith.constant 0 : i32
    return %c0_i32, %c0_i32_0 : i32, i32
  }
  func.func @transform_1(%arg0: i32) -> (i32, i32) {
    %c0_i32 = arith.constant 0 : i32
    %c0_i32_0 = arith.constant 0 : i32
    %c0_i32_1 = arith.constant 0 : i32
    return %c0_i32, %c0_i32_0 : i32, i32
  }
  func.func @transform_2(%arg0: i32) -> (i32, i32) {
    %c0_i32 = arith.constant 0 : i32
    %c0_i32_0 = arith.constant 0 : i32
    %c0_i32_1 = arith.constant 0 : i32
    return %c0_i32, %c0_i32_0 : i32, i32
  }
  func.func @transform_3(%arg0: i32) -> (i32, i32) {
    %c0_i32 = arith.constant 0 : i32
    %c0_i32_0 = arith.constant 0 : i32
    %c0_i32_1 = arith.constant 0 : i32
    return %c0_i32, %c0_i32_0 : i32, i32
  }
}

</mosaic_0001>

<llo_original>
// kernel: cnn3d_forward.3
$region0: #{cnn3d_forward.3}
  #allocation0 [shape = 'u32[]', space=smem, size = 0x4, offset = 0x4, fixed_abs, tag = 'smem constant byte address 0x4 - core index']
  #allocation1 [shape = 'u32[144,128]{1,0:T(1,128)}', space=vmem, size = 0x12000, scoped, tag = 'internal scratch']
  %s0 = inlined_call_operand.vmem [shape: f32[216,63], index: 0, kind: input, shape index: {}]
  %s1 = inlined_call_operand.vmem [shape: f32[63,2], index: 1, kind: input, shape index: {}]
  %s2 = inlined_call_operand.vmem [shape: f32[1,2], index: 2, kind: input, shape index: {}]
  %s3 = inlined_call_operand.vmem [shape: f32[216,2], index: 3, kind: output, shape index: {}]
  %s4 = sld [smem:[#allocation0]]
  $region22: #{cnn3d_forward.3} parent=0
    _
  %s6 = ssub.s32 1, %s4
  %s7 = scalar_select 0, %s6, %s4
  // Predicated region
  $region2: #{cnn3d_forward.3} parent=0 // pred_check
    _
  $region3: #{cnn3d_forward.3} parent=0 // pred_check_branch
    %9 = sbr.rel (0) target = $region5
  $region4: #{cnn3d_forward.3} parent=0 // pred_region
    _
  $region5: #{cnn3d_forward.3} parent=0 // pred_fallthru
    _
  // Predicated region
  $region6: #{cnn3d_forward.3} parent=0 // pred_check
    _
  $region7: #{cnn3d_forward.3} parent=0 // pred_check_branch
    %11 = sbr.rel (0) target = $region9
  $region8: #{cnn3d_forward.3} parent=0 // pred_region
    _
  $region9: #{cnn3d_forward.3} parent=0 // pred_fallthru
    _
  // Predicated region
  $region10: #{cnn3d_forward.3} parent=0 // pred_check
    _
  $region11: #{cnn3d_forward.3} parent=0 // pred_check_branch
    %13 = sbr.rel (0) target = $region13
  $region12: #{cnn3d_forward.3} parent=0 // pred_region
    _
  $region13: #{cnn3d_forward.3} parent=0 // pred_fallthru
    _
  %v14 = vld [vmem:[%s0] sm:$0xff]
  %v15 = vld [vmem:[%s0 + $0x8] sm:$0xff]
  %v16 = vld [vmem:[%s0 + $0x10] sm:$0xff]
  %v17 = vld [vmem:[%s0 + $0x18] sm:$0xff]
  %v18 = vld [vmem:[%s0 + $0x20] sm:$0xff]
  %v19 = vld [vmem:[%s0 + $0x28] sm:$0xff]
  %v20 = vld [vmem:[%s0 + $0x30] sm:$0xff]
  %v21 = vld [vmem:[%s0 + $0x38] sm:$0xff]
  %v22 = vld [vmem:[%s0 + $0x40] sm:$0xff]
  %v23 = vld [vmem:[%s0 + $0x48] sm:$0xff]
  %v24 = vld [vmem:[%s0 + $0x50] sm:$0xff]
  %v25 = vld [vmem:[%s0 + $0x58] sm:$0xff]
  %v26 = vld [vmem:[%s0 + $0x60] sm:$0xff]
  %v27 = vld [vmem:[%s0 + $0x68] sm:$0xff]
  %v28 = vld [vmem:[%s0 + $0x70] sm:$0xff]
  %v29 = vld [vmem:[%s0 + $0x78] sm:$0xff]
  %v30 = vld [vmem:[%s0 + $0x80] sm:$0xff]
  %v31 = vld [vmem:[%s0 + $0x88] sm:$0xff]
  %v32 = vld [vmem:[%s0 + $0x90] sm:$0xff]
  %v33 = vld [vmem:[%s0 + $0x98] sm:$0xff]
  %v34 = vld [vmem:[%s0 + $0xa0] sm:$0xff]
  %v35 = vld [vmem:[%s0 + $0xa8] sm:$0xff]
  %v36 = vld [vmem:[%s0 + $0xb0] sm:$0xff]
  %v37 = vld [vmem:[%s0 + $0xb8] sm:$0xff]
  %v38 = vld [vmem:[%s0 + $0xc0] sm:$0xff]
  %v39 = vld [vmem:[%s0 + $0xc8] sm:$0xff]
  %v40 = vld [vmem:[%s0 + $0xd0] sm:$0xff]
  %v41 = vld [vmem:[%s1] sm:$0xff]
  %v42 = vld [vmem:[%s1 + $0x8] sm:$0xff]
  %v43 = vld [vmem:[%s1 + $0x10] sm:$0xff]
  %v44 = vld [vmem:[%s1 + $0x18] sm:$0xff]
  %v45 = vld [vmem:[%s1 + $0x20] sm:$0xff]
  %v46 = vld [vmem:[%s1 + $0x28] sm:$0xff]
  %v47 = vld [vmem:[%s1 + $0x30] sm:$0xff]
  %v48 = vld [vmem:[%s1 + $0x38] sm:$0x7f]
  %v49 = vld [vmem:[%s2] sm:$0x1]
  %v51 = vlaneseq
  %v52 = vshrl.u32 %v51, 7
  %v53 = vsub.s32 0, %v52
  %v54 = vrot.slane %v49, %v53
  %vm56 = vcmask 515072
  %v58 = vsel %vm56, %v14, 0
  %v61 = vsel %vm56, %v15, 0
  %v64 = vsel %vm56, %v16, 0
  %v67 = vsel %vm56, %v17, 0
  %v70 = vsel %vm56, %v18, 0
  %v73 = vsel %vm56, %v19, 0
  %v76 = vsel %vm56, %v20, 0
  %v79 = vsel %vm56, %v21, 0
  %v82 = vsel %vm56, %v22, 0
  %v85 = vsel %vm56, %v23, 0
  %v88 = vsel %vm56, %v24, 0
  %v91 = vsel %vm56, %v25, 0
  %v94 = vsel %vm56, %v26, 0
  %v97 = vsel %vm56, %v27, 0
  %v100 = vsel %vm56, %v28, 0
  %v103 = vsel %vm56, %v29, 0
  %v106 = vsel %vm56, %v30, 0
  %v109 = vsel %vm56, %v31, 0
  %v112 = vsel %vm56, %v32, 0
  %v115 = vsel %vm56, %v33, 0
  %v118 = vsel %vm56, %v34, 0
  %v121 = vsel %vm56, %v35, 0
  %v124 = vsel %vm56, %v36, 0
  %v127 = vsel %vm56, %v37, 0
  %v130 = vsel %vm56, %v38, 0
  %v133 = vsel %vm56, %v39, 0
  %v136 = vsel %vm56, %v40, 0
  %vm138 = vcmask 1046528
  %v140 = vsel %vm138, %v48, 0
  %142 = vmatprep.subr.mxu0 0.0
  %143 = vmatpush1.msra.mxu0 0.0
  %144 = vmatprep.subr.mxu0 0.0
  %145 = vmatpush1.msra.mxu0 0.0
  %146 = vmatprep.subr.mxu0 0.0
  %147 = vmatpush1.msra.mxu0 0.0
  %148 = vmatprep.subr.mxu0 0.0
  %149 = vmatpush1.msra.mxu0 0.0
  %150 = vmatprep.subr.mxu0 0.0
  %151 = vmatpush1.msra.mxu0 0.0
  %152 = vmatprep.subr.mxu0 0.0
  %153 = vmatpush1.msra.mxu0 0.0
  %154 = vmatprep.subr.mxu0 0.0
  %155 = vmatpush1.msra.mxu0 0.0
  %156 = vmatprep.subr.mxu0 0.0
  %157 = vmatpush1.msra.mxu0 0.0
  %158 = vmatprep.subr.mxu0 0.0
  %159 = vmatpush1.msra.mxu0 %v140
  %160 = vmatprep.subr.mxu0 0.0
  %161 = vmatpush1.msra.mxu0 %v47
  %162 = vmatprep.subr.mxu0 0.0
  %163 = vmatpush1.msra.mxu0 %v46
  %164 = vmatprep.subr.mxu0 0.0
  %165 = vmatpush1.msra.mxu0 %v45
  %166 = vmatprep.subr.mxu0 0.0
  %167 = vmatpush1.msra.mxu0 %v44
  %168 = vmatprep.subr.mxu0 0.0
  %169 = vmatpush1.msra.mxu0 %v43
  %170 = vmatprep.subr.mxu0 0.0
  %171 = vmatpush1.msra.mxu0 %v42
  %172 = vmatprep.subr.mxu0 0.0
  %173 = vmatpush1.msra.mxu0 %v41
  %174 = vmatprep.subr.mxu0 0.0
  %175 = vmatpush2.msra.mxu0 0.0
  %176 = vmatprep.subr.mxu0 0.0
  %177 = vmatpush2.msra.mxu0 0.0
  %178 = vmatprep.subr.mxu0 0.0
  %179 = vmatpush2.msra.mxu0 0.0
  %180 = vmatprep.subr.mxu0 0.0
  %181 = vmatpush2.msra.mxu0 0.0
  %182 = vmatprep.subr.mxu0 0.0
  %183 = vmatpush2.msra.mxu0 0.0
  %184 = vmatprep.subr.mxu0 0.0
  %185 = vmatpush2.msra.mxu0 0.0
  %186 = vmatprep.subr.mxu0 0.0
  %187 = vmatpush2.msra.mxu0 0.0
  %188 = vmatprep.subr.mxu0 0.0
  %189 = vmatpush2.msra.mxu0 0.0
  %190 = vmatprep.subr.mxu0 0.0
  %191 = vmatpush2.msra.mxu0 0.0
  %192 = vmatprep.subr.mxu0 0.0
  %193 = vmatpush2.msra.mxu0 0.0
  %194 = vmatprep.subr.mxu0 0.0
  %195 = vmatpush2.msra.mxu0 0.0
  %196 = vmatprep.subr.mxu0 0.0
  %197 = vmatpush2.msra.mxu0 0.0
  %198 = vmatprep.subr.mxu0 0.0
  %199 = vmatpush2.msra.mxu0 0.0
  %200 = vmatprep.subr.mxu0 0.0
  %201 = vmatpush2.msra.mxu0 0.0
  %202 = vmatprep.subr.mxu0 0.0
  %203 = vmatpush2.msra.mxu0 0.0
  %204 = vmatprep.subr.mxu0 0.0
  %205 = vmatpush2.msra.mxu0 0.0
  %206 = vmatprep.mubr.f32.mxu0 0.0
  %207 = vmatmul.mubr.f32.gmra.mxu0 %v58
  %v208 = vpop.f32.mrf.mxu0
  %v209 = vadd.f32 %v54, %v208
  %v210 = vpop.f32.mrf.mxu0
  %211 = vmatprep.mubr.f32.mxu0 0.0
  %212 = vmatmul.mubr.f32.gmra.mxu0 %v61
  %v213 = vpop.f32.mrf.mxu0
  %v214 = vadd.f32 %v54, %v213
  %v215 = vpop.f32.mrf.mxu0
  %216 = vmatprep.mubr.f32.mxu0 0.0
  %217 = vmatmul.mubr.f32.gmra.mxu0 %v64
  %v218 = vpop.f32.mrf.mxu0
  %v219 = vadd.f32 %v54, %v218
  %v220 = vpop.f32.mrf.mxu0
  %221 = vmatprep.mubr.f32.mxu0 0.0
  %222 = vmatmul.mubr.f32.gmra.mxu0 %v67
  %v223 = vpop.f32.mrf.mxu0
  %v224 = vadd.f32 %v54, %v223
  %v225 = vpop.f32.mrf.mxu0
  %226 = vmatprep.mubr.f32.mxu0 0.0
  %227 = vmatmul.mubr.f32.gmra.mxu0 %v70
  %v228 = vpop.f32.mrf.mxu0
  %v229 = vadd.f32 %v54, %v228
  %v230 = vpop.f32.mrf.mxu0
  %231 = vmatprep.mubr.f32.mxu0 0.0
  %232 = vmatmul.mubr.f32.gmra.mxu0 %v73
  %v233 = vpop.f32.mrf.mxu0
  %v234 = vadd.f32 %v54, %v233
  %v235 = vpop.f32.mrf.mxu0
  %236 = vmatprep.mubr.f32.mxu0 0.0
  %237 = vmatmul.mubr.f32.gmra.mxu0 %v76
  %v238 = vpop.f32.mrf.mxu0
  %v239 = vadd.f32 %v54, %v238
  %v240 = vpop.f32.mrf.mxu0
  %241 = vmatprep.mubr.f32.mxu0 0.0
  %242 = vmatmul.mubr.f32.gmra.mxu0 %v79
  %v243 = vpop.f32.mrf.mxu0
  %v244 = vadd.f32 %v54, %v243
  %v245 = vpop.f32.mrf.mxu0
  %246 = vmatprep.mubr.f32.mxu0 0.0
  %247 = vmatmul.mubr.f32.gmra.mxu0 %v82
  %v248 = vpop.f32.mrf.mxu0
  %v249 = vadd.f32 %v54, %v248
  %v250 = vpop.f32.mrf.mxu0
  %251 = vmatprep.mubr.f32.mxu0 0.0
  %252 = vmatmul.mubr.f32.gmra.mxu0 %v85
  %v253 = vpop.f32.mrf.mxu0
  %v254 = vadd.f32 %v54, %v253
  %v255 = vpop.f32.mrf.mxu0
  %256 = vmatprep.mubr.f32.mxu0 0.0
  %257 = vmatmul.mubr.f32.gmra.mxu0 %v88
  %v258 = vpop.f32.mrf.mxu0
  %v259 = vadd.f32 %v54, %v258
  %v260 = vpop.f32.mrf.mxu0
  %261 = vmatprep.mubr.f32.mxu0 0.0
  %262 = vmatmul.mubr.f32.gmra.mxu0 %v91
  %v263 = vpop.f32.mrf.mxu0
  %v264 = vadd.f32 %v54, %v263
  %v265 = vpop.f32.mrf.mxu0
  %266 = vmatprep.mubr.f32.mxu0 0.0
  %267 = vmatmul.mubr.f32.gmra.mxu0 %v94
  %v268 = vpop.f32.mrf.mxu0
  %v269 = vadd.f32 %v54, %v268
  %v270 = vpop.f32.mrf.mxu0
  %271 = vmatprep.mubr.f32.mxu0 0.0
  %272 = vmatmul.mubr.f32.gmra.mxu0 %v97
  %v273 = vpop.f32.mrf.mxu0
  %v274 = vadd.f32 %v54, %v273
  %v275 = vpop.f32.mrf.mxu0
  %276 = vmatprep.mubr.f32.mxu0 0.0
  %277 = vmatmul.mubr.f32.gmra.mxu0 %v100
  %v278 = vpop.f32.mrf.mxu0
  %v279 = vadd.f32 %v54, %v278
  %v280 = vpop.f32.mrf.mxu0
  %281 = vmatprep.mubr.f32.mxu0 0.0
  %282 = vmatmul.mubr.f32.gmra.mxu0 %v103
  %v283 = vpop.f32.mrf.mxu0
  %v284 = vadd.f32 %v54, %v283
  %v285 = vpop.f32.mrf.mxu0
  %286 = vmatprep.mubr.f32.mxu0 0.0
  %287 = vmatmul.mubr.f32.gmra.mxu0 %v106
  %v288 = vpop.f32.mrf.mxu0
  %v289 = vadd.f32 %v54, %v288
  %v290 = vpop.f32.mrf.mxu0
  %291 = vmatprep.mubr.f32.mxu0 0.0
  %292 = vmatmul.mubr.f32.gmra.mxu0 %v109
  %v293 = vpop.f32.mrf.mxu0
  %v294 = vadd.f32 %v54, %v293
  %v295 = vpop.f32.mrf.mxu0
  %296 = vmatprep.mubr.f32.mxu0 0.0
  %297 = vmatmul.mubr.f32.gmra.mxu0 %v112
  %v298 = vpop.f32.mrf.mxu0
  %v299 = vadd.f32 %v54, %v298
  %v300 = vpop.f32.mrf.mxu0
  %301 = vmatprep.mubr.f32.mxu0 0.0
  %302 = vmatmul.mubr.f32.gmra.mxu0 %v115
  %v303 = vpop.f32.mrf.mxu0
  %v304 = vadd.f32 %v54, %v303
  %v305 = vpop.f32.mrf.mxu0
  %306 = vmatprep.mubr.f32.mxu0 0.0
  %307 = vmatmul.mubr.f32.gmra.mxu0 %v118
  %v308 = vpop.f32.mrf.mxu0
  %v309 = vadd.f32 %v54, %v308
  %v310 = vpop.f32.mrf.mxu0
  %311 = vmatprep.mubr.f32.mxu0 0.0
  %312 = vmatmul.mubr.f32.gmra.mxu0 %v121
  %v313 = vpop.f32.mrf.mxu0
  %v314 = vadd.f32 %v54, %v313
  %v315 = vpop.f32.mrf.mxu0
  %316 = vmatprep.mubr.f32.mxu0 0.0
  %317 = vmatmul.mubr.f32.gmra.mxu0 %v124
  %v318 = vpop.f32.mrf.mxu0
  %v319 = vadd.f32 %v54, %v318
  %v320 = vpop.f32.mrf.mxu0
  %321 = vmatprep.mubr.f32.mxu0 0.0
  %322 = vmatmul.mubr.f32.gmra.mxu0 %v127
  %v323 = vpop.f32.mrf.mxu0
  %v324 = vadd.f32 %v54, %v323
  %v325 = vpop.f32.mrf.mxu0
  %326 = vmatprep.mubr.f32.mxu0 0.0
  %327 = vmatmul.mubr.f32.gmra.mxu0 %v130
  %v328 = vpop.f32.mrf.mxu0
  %v329 = vadd.f32 %v54, %v328
  %v330 = vpop.f32.mrf.mxu0
  %331 = vmatprep.mubr.f32.mxu0 0.0
  %332 = vmatmul.mubr.f32.gmra.mxu0 %v133
  %v333 = vpop.f32.mrf.mxu0
  %v334 = vadd.f32 %v54, %v333
  %v335 = vpop.f32.mrf.mxu0
  %336 = vmatprep.mubr.f32.mxu0 0.0
  %337 = vmatmul.mubr.f32.gmra.mxu0 %v136
  %v338 = vpop.f32.mrf.mxu0
  %v339 = vadd.f32 %v54, %v338
  %v340 = vpop.f32.mrf.mxu0
  %341 = vdwg.mxu0
  %v342 = vmax.f32 %v209, 0.0
  %v343 = vmax.f32 %v214, 0.0
  %v344 = vmax.f32 %v219, 0.0
  %v345 = vmax.f32 %v224, 0.0
  %v346 = vmax.f32 %v229, 0.0
  %v347 = vmax.f32 %v234, 0.0
  %v348 = vmax.f32 %v239, 0.0
  %v349 = vmax.f32 %v244, 0.0
  %v350 = vmax.f32 %v249, 0.0
  %v351 = vmax.f32 %v254, 0.0
  %v352 = vmax.f32 %v259, 0.0
  %v353 = vmax.f32 %v264, 0.0
  %v354 = vmax.f32 %v269, 0.0
  %v355 = vmax.f32 %v274, 0.0
  %v356 = vmax.f32 %v279, 0.0
  %v357 = vmax.f32 %v284, 0.0
  %v358 = vmax.f32 %v289, 0.0
  %v359 = vmax.f32 %v294, 0.0
  %v360 = vmax.f32 %v299, 0.0
  %v361 = vmax.f32 %v304, 0.0
  %v362 = vmax.f32 %v309, 0.0
  %v363 = vmax.f32 %v314, 0.0
  %v364 = vmax.f32 %v319, 0.0
  %v365 = vmax.f32 %v324, 0.0
  %v366 = vmax.f32 %v329, 0.0
  %v367 = vmax.f32 %v334, 0.0
  %v368 = vmax.f32 %v339, 0.0
  %vm369 = vcmask 15360
  %370 = vst.msk [vmem:[%s3] sm:$0xff] %vm369, %v342
  %371 = vst.msk [vmem:[%s3 + $0x8] sm:$0xff] %vm369, %v343
  %372 = vst.msk [vmem:[%s3 + $0x10] sm:$0xff] %vm369, %v344
  %373 = vst.msk [vmem:[%s3 + $0x18] sm:$0xff] %vm369, %v345
  %374 = vst.msk [vmem:[%s3 + $0x20] sm:$0xff] %vm369, %v346
  %375 = vst.msk [vmem:[%s3 + $0x28] sm:$0xff] %vm369, %v347
  %376 = vst.msk [vmem:[%s3 + $0x30] sm:$0xff] %vm369, %v348
  %377 = vst.msk [vmem:[%s3 + $0x38] sm:$0xff] %vm369, %v349
  %378 = vst.msk [vmem:[%s3 + $0x40] sm:$0xff] %vm369, %v350
  %379 = vst.msk [vmem:[%s3 + $0x48] sm:$0xff] %vm369, %v351
  %380 = vst.msk [vmem:[%s3 + $0x50] sm:$0xff] %vm369, %v352
  %381 = vst.msk [vmem:[%s3 + $0x58] sm:$0xff] %vm369, %v353
  %382 = vst.msk [vmem:[%s3 + $0x60] sm:$0xff] %vm369, %v354
  %383 = vst.msk [vmem:[%s3 + $0x68] sm:$0xff] %vm369, %v355
  %384 = vst.msk [vmem:[%s3 + $0x70] sm:$0xff] %vm369, %v356
  %385 = vst.msk [vmem:[%s3 + $0x78] sm:$0xff] %vm369, %v357
  %386 = vst.msk [vmem:[%s3 + $0x80] sm:$0xff] %vm369, %v358
  %387 = vst.msk [vmem:[%s3 + $0x88] sm:$0xff] %vm369, %v359
  %388 = vst.msk [vmem:[%s3 + $0x90] sm:$0xff] %vm369, %v360
  %389 = vst.msk [vmem:[%s3 + $0x98] sm:$0xff] %vm369, %v361
  %390 = vst.msk [vmem:[%s3 + $0xa0] sm:$0xff] %vm369, %v362
  %391 = vst.msk [vmem:[%s3 + $0xa8] sm:$0xff] %vm369, %v363
  %392 = vst.msk [vmem:[%s3 + $0xb0] sm:$0xff] %vm369, %v364
  %393 = vst.msk [vmem:[%s3 + $0xb8] sm:$0xff] %vm369, %v365
  %394 = vst.msk [vmem:[%s3 + $0xc0] sm:$0xff] %vm369, %v366
  %395 = vst.msk [vmem:[%s3 + $0xc8] sm:$0xff] %vm369, %v367
  %396 = vst.msk [vmem:[%s3 + $0xd0] sm:$0xff] %vm369, %v368
  // Predicated region
  $region14: #{cnn3d_forward.3} parent=0 // pred_check
    _
  $region15: #{cnn3d_forward.3} parent=0 // pred_check_branch
    %398 = sbr.rel (0) target = $region17
  $region16: #{cnn3d_forward.3} parent=0 // pred_region
    _
  $region17: #{cnn3d_forward.3} parent=0 // pred_fallthru
    _
  // Predicated region
  $region18: #{cnn3d_forward.3} parent=0 // pred_check
    _
  $region19: #{cnn3d_forward.3} parent=0 // pred_check_branch
    %400 = sbr.rel (0) target = $region21
  $region20: #{cnn3d_forward.3} parent=0 // pred_region
    _
  $region21: #{cnn3d_forward.3} parent=0 // pred_fallthru
    _

// kernel: cnn3d_forward.4
$region0: #{cnn3d_forward.4}
  #allocation0 [shape = 'u32[]', space=smem, size = 0x4, offset = 0x4, fixed_abs, tag = 'smem constant byte address 0x4 - core index']
  #allocation1 [shape = 'u32[144,128]{1,0:T(1,128)}', space=vmem, size = 0x12000, scoped, tag = 'internal scratch']
  %s0 = inlined_call_operand.vmem [shape: f32[24,54], index: 0, kind: input, shape index: {}]
  %s1 = inlined_call_operand.vmem [shape: f32[54,4], index: 1, kind: input, shape index: {}]
  %s2 = inlined_call_operand.vmem [shape: f32[1,4], index: 2, kind: input, shape index: {}]
  %s3 = inlined_call_operand.vmem [shape: f32[24,4], index: 3, kind: output, shape index: {}]
  %s4 = sld [smem:[#allocation0]]
  $region22: #{cnn3d_forward.4} parent=0
    _
  %s6 = ssub.s32 1, %s4
  %s7 = scalar_select 0, %s6, %s4
  // Predicated region
  $region2: #{cnn3d_forward.4} parent=0 // pred_check
    _
  $region3: #{cnn3d_forward.4} parent=0 // pred_check_branch
    %9 = sbr.rel (0) target = $region5
  $region4: #{cnn3d_forward.4} parent=0 // pred_region
    _
  $region5: #{cnn3d_forward.4} parent=0 // pred_fallthru
    _
  // Predicated region
  $region6: #{cnn3d_forward.4} parent=0 // pred_check
    _
  $region7: #{cnn3d_forward.4} parent=0 // pred_check_branch
    %11 = sbr.rel (0) target = $region9
  $region8: #{cnn3d_forward.4} parent=0 // pred_region
    _
  $region9: #{cnn3d_forward.4} parent=0 // pred_fallthru
    _
  // Predicated region
  $region10: #{cnn3d_forward.4} parent=0 // pred_check
    _
  $region11: #{cnn3d_forward.4} parent=0 // pred_check_branch
    %13 = sbr.rel (0) target = $region13
  $region12: #{cnn3d_forward.4} parent=0 // pred_region
    _
  $region13: #{cnn3d_forward.4} parent=0 // pred_fallthru
    _
  %v14 = vld [vmem:[%s0] sm:$0xff]
  %v15 = vld [vmem:[%s0 + $0x8] sm:$0xff]
  %v16 = vld [vmem:[%s0 + $0x10] sm:$0xff]
  %v17 = vld [vmem:[%s1] sm:$0xff]
  %v18 = vld [vmem:[%s1 + $0x8] sm:$0xff]
  %v19 = vld [vmem:[%s1 + $0x10] sm:$0xff]
  %v20 = vld [vmem:[%s1 + $0x18] sm:$0xff]
  %v21 = vld [vmem:[%s1 + $0x20] sm:$0xff]
  %v22 = vld [vmem:[%s1 + $0x28] sm:$0xff]
  %v23 = vld [vmem:[%s1 + $0x30] sm:$0x3f]
  %v24 = vld [vmem:[%s2] sm:$0x1]
  %v26 = vlaneseq
  %v27 = vshrl.u32 %v26, 7
  %v28 = vsub.s32 0, %v27
  %v29 = vrot.slane %v24, %v28
  %vm31 = vcmask 441344
  %v33 = vsel %vm31, %v14, 0
  %v36 = vsel %vm31, %v15, 0
  %v39 = vsel %vm31, %v16, 0
  %vm41 = vcmask 1045504
  %v43 = vsel %vm41, %v23, 0
  %45 = vmatprep.subr.mxu0 0.0
  %46 = vmatpush1.msra.mxu0 0.0
  %47 = vmatprep.subr.mxu0 0.0
  %48 = vmatpush1.msra.mxu0 0.0
  %49 = vmatprep.subr.mxu0 0.0
  %50 = vmatpush1.msra.mxu0 0.0
  %51 = vmatprep.subr.mxu0 0.0
  %52 = vmatpush1.msra.mxu0 0.0
  %53 = vmatprep.subr.mxu0 0.0
  %54 = vmatpush1.msra.mxu0 0.0
  %55 = vmatprep.subr.mxu0 0.0
  %56 = vmatpush1.msra.mxu0 0.0
  %57 = vmatprep.subr.mxu0 0.0
  %58 = vmatpush1.msra.mxu0 0.0
  %59 = vmatprep.subr.mxu0 0.0
  %60 = vmatpush1.msra.mxu0 0.0
  %61 = vmatprep.subr.mxu0 0.0
  %62 = vmatpush1.msra.mxu0 0.0
  %63 = vmatprep.subr.mxu0 0.0
  %64 = vmatpush1.msra.mxu0 %v43
  %65 = vmatprep.subr.mxu0 0.0
  %66 = vmatpush1.msra.mxu0 %v22
  %67 = vmatprep.subr.mxu0 0.0
  %68 = vmatpush1.msra.mxu0 %v21
  %69 = vmatprep.subr.mxu0 0.0
  %70 = vmatpush1.msra.mxu0 %v20
  %71 = vmatprep.subr.mxu0 0.0
  %72 = vmatpush1.msra.mxu0 %v19
  %73 = vmatprep.subr.mxu0 0.0
  %74 = vmatpush1.msra.mxu0 %v18
  %75 = vmatprep.subr.mxu0 0.0
  %76 = vmatpush1.msra.mxu0 %v17
  %77 = vmatprep.subr.mxu0 0.0
  %78 = vmatpush2.msra.mxu0 0.0
  %79 = vmatprep.subr.mxu0 0.0
  %80 = vmatpush2.msra.mxu0 0.0
  %81 = vmatprep.subr.mxu0 0.0
  %82 = vmatpush2.msra.mxu0 0.0
  %83 = vmatprep.subr.mxu0 0.0
  %84 = vmatpush2.msra.mxu0 0.0
  %85 = vmatprep.subr.mxu0 0.0
  %86 = vmatpush2.msra.mxu0 0.0
  %87 = vmatprep.subr.mxu0 0.0
  %88 = vmatpush2.msra.mxu0 0.0
  %89 = vmatprep.subr.mxu0 0.0
  %90 = vmatpush2.msra.mxu0 0.0
  %91 = vmatprep.subr.mxu0 0.0
  %92 = vmatpush2.msra.mxu0 0.0
  %93 = vmatprep.subr.mxu0 0.0
  %94 = vmatpush2.msra.mxu0 0.0
  %95 = vmatprep.subr.mxu0 0.0
  %96 = vmatpush2.msra.mxu0 0.0
  %97 = vmatprep.subr.mxu0 0.0
  %98 = vmatpush2.msra.mxu0 0.0
  %99 = vmatprep.subr.mxu0 0.0
  %100 = vmatpush2.msra.mxu0 0.0
  %101 = vmatprep.subr.mxu0 0.0
  %102 = vmatpush2.msra.mxu0 0.0
  %103 = vmatprep.subr.mxu0 0.0
  %104 = vmatpush2.msra.mxu0 0.0
  %105 = vmatprep.subr.mxu0 0.0
  %106 = vmatpush2.msra.mxu0 0.0
  %107 = vmatprep.subr.mxu0 0.0
  %108 = vmatpush2.msra.mxu0 0.0
  %109 = vmatprep.mubr.f32.mxu0 0.0
  %110 = vmatmul.mubr.f32.gmra.mxu0 %v33
  %v111 = vpop.f32.mrf.mxu0
  %v112 = vadd.f32 %v29, %v111
  %v113 = vpop.f32.mrf.mxu0
  %114 = vmatprep.mubr.f32.mxu0 0.0
  %115 = vmatmul.mubr.f32.gmra.mxu0 %v36
  %v116 = vpop.f32.mrf.mxu0
  %v117 = vadd.f32 %v29, %v116
  %v118 = vpop.f32.mrf.mxu0
  %119 = vmatprep.mubr.f32.mxu0 0.0
  %120 = vmatmul.mubr.f32.gmra.mxu0 %v39
  %v121 = vpop.f32.mrf.mxu0
  %v122 = vadd.f32 %v29, %v121
  %v123 = vpop.f32.mrf.mxu0
  %124 = vdwg.mxu0
  %v125 = vmax.f32 %v112, 0.0
  %v126 = vmax.f32 %v117, 0.0
  %v127 = vmax.f32 %v122, 0.0
  %vm128 = vcmask 31744
  %129 = vst.msk [vmem:[%s3] sm:$0xff] %vm128, %v125
  %130 = vst.msk [vmem:[%s3 + $0x8] sm:$0xff] %vm128, %v126
  %131 = vst.msk [vmem:[%s3 + $0x10] sm:$0xff] %vm128, %v127
  // Predicated region
  $region14: #{cnn3d_forward.4} parent=0 // pred_check
    _
  $region15: #{cnn3d_forward.4} parent=0 // pred_check_branch
    %133 = sbr.rel (0) target = $region17
  $region16: #{cnn3d_forward.4} parent=0 // pred_region
    _
  $region17: #{cnn3d_forward.4} parent=0 // pred_fallthru
    _
  // Predicated region
  $region18: #{cnn3d_forward.4} parent=0 // pred_check
    _
  $region19: #{cnn3d_forward.4} parent=0 // pred_check_branch
    %135 = sbr.rel (0) target = $region21
  $region20: #{cnn3d_forward.4} parent=0 // pred_region
    _
  $region21: #{cnn3d_forward.4} parent=0 // pred_fallthru
    _

// kernel: cnn3d_forward.5
$region0: #{cnn3d_forward.5}
  #allocation0 [shape = 'u32[]', space=smem, size = 0x4, offset = 0x4, fixed_abs, tag = 'smem constant byte address 0x4 - core index']
  #allocation1 [shape = 'u32[144,128]{1,0:T(1,128)}', space=vmem, size = 0x12000, scoped, tag = 'internal scratch']
  %s0 = inlined_call_operand.vmem [shape: f32[2,48], index: 0, kind: input, shape index: {}]
  %s1 = inlined_call_operand.vmem [shape: f32[48,10], index: 1, kind: input, shape index: {}]
  %s2 = inlined_call_operand.vmem [shape: f32[1,10], index: 2, kind: input, shape index: {}]
  %s3 = inlined_call_operand.hbm [shape: f32[2,10], index: 3, kind: output, shape index: {}]
  %s4 = sld [smem:[#allocation0]]
  $region22: #{cnn3d_forward.5} parent=0
    _
  %s6 = ssub.s32 1, %s4
  %s7 = scalar_select 0, %s6, %s4
  $region1: #{cnn3d_forward.5} parent=0
    #allocation2 [shape = 'u8[1024]{0}', space=vmem, size = 0x400, scoped, tag = 'output window, operand 0, single buffered']
    #allocation3 [shape = 's32[1]{0}', space=sflag, size = 0x4, scoped, tag = 'scoped memory for cnn3d_forward.5']
    %8 = vsyncpa [#allocation3], 0
    // Predicated region
    $region2: #{cnn3d_forward.5} parent=1 // pred_check
      _
    $region3: #{cnn3d_forward.5} parent=1 // pred_check_branch
      %10 = sbr.rel (0) target = $region5
    $region4: #{cnn3d_forward.5} parent=1 // pred_region
      _
    $region5: #{cnn3d_forward.5} parent=1 // pred_fallthru
      _
    // Predicated region
    $region6: #{cnn3d_forward.5} parent=1 // pred_check
      _
    $region7: #{cnn3d_forward.5} parent=1 // pred_check_branch
      %12 = sbr.rel (0) target = $region9
    $region8: #{cnn3d_forward.5} parent=1 // pred_region
      _
    $region9: #{cnn3d_forward.5} parent=1 // pred_fallthru
      _
    // Predicated region
    $region10: #{cnn3d_forward.5} parent=1 // pred_check
      _
    $region11: #{cnn3d_forward.5} parent=1 // pred_check_branch
      %14 = sbr.rel (0) target = $region13
    $region12: #{cnn3d_forward.5} parent=1 // pred_region
      _
    $region13: #{cnn3d_forward.5} parent=1 // pred_fallthru
      _
    %v15 = vld [vmem:[%s0] sm:$0x3]
    %v16 = vld [vmem:[%s1] sm:$0xff]
    %v17 = vld [vmem:[%s1 + $0x8] sm:$0xff]
    %v18 = vld [vmem:[%s1 + $0x10] sm:$0xff]
    %v19 = vld [vmem:[%s1 + $0x18] sm:$0xff]
    %v20 = vld [vmem:[%s1 + $0x20] sm:$0xff]
    %v21 = vld [vmem:[%s1 + $0x28] sm:$0xff]
    %v22 = vld [vmem:[%s2] sm:$0x1]
    %v24 = vlaneseq
    %v25 = vshrl.u32 %v24, 7
    %v26 = vsub.s32 0, %v25
    %v27 = vrot.slane %v22, %v26
    %vm29 = vcmask 392192
    %v31 = vsel %vm29, %v15, 0
    %33 = vmatprep.subr.mxu0 0.0
    %34 = vmatpush1.msra.mxu0 0.0
    %35 = vmatprep.subr.mxu0 0.0
    %36 = vmatpush1.msra.mxu0 0.0
    %37 = vmatprep.subr.mxu0 0.0
    %38 = vmatpush1.msra.mxu0 0.0
    %39 = vmatprep.subr.mxu0 0.0
    %40 = vmatpush1.msra.mxu0 0.0
    %41 = vmatprep.subr.mxu0 0.0
    %42 = vmatpush1.msra.mxu0 0.0
    %43 = vmatprep.subr.mxu0 0.0
    %44 = vmatpush1.msra.mxu0 0.0
    %45 = vmatprep.subr.mxu0 0.0
    %46 = vmatpush1.msra.mxu0 0.0
    %47 = vmatprep.subr.mxu0 0.0
    %48 = vmatpush1.msra.mxu0 0.0
    %49 = vmatprep.subr.mxu0 0.0
    %50 = vmatpush1.msra.mxu0 0.0
    %51 = vmatprep.subr.mxu0 0.0
    %52 = vmatpush1.msra.mxu0 0.0
    %53 = vmatprep.subr.mxu0 0.0
    %54 = vmatpush1.msra.mxu0 %v21
    %55 = vmatprep.subr.mxu0 0.0
    %56 = vmatpush1.msra.mxu0 %v20
    %57 = vmatprep.subr.mxu0 0.0
    %58 = vmatpush1.msra.mxu0 %v19
    %59 = vmatprep.subr.mxu0 0.0
    %60 = vmatpush1.msra.mxu0 %v18
    %61 = vmatprep.subr.mxu0 0.0
    %62 = vmatpush1.msra.mxu0 %v17
    %63 = vmatprep.subr.mxu0 0.0
    %64 = vmatpush1.msra.mxu0 %v16
    %65 = vmatprep.subr.mxu0 0.0
    %66 = vmatpush2.msra.mxu0 0.0
    %67 = vmatprep.subr.mxu0 0.0
    %68 = vmatpush2.msra.mxu0 0.0
    %69 = vmatprep.subr.mxu0 0.0
    %70 = vmatpush2.msra.mxu0 0.0
    %71 = vmatprep.subr.mxu0 0.0
    %72 = vmatpush2.msra.mxu0 0.0
    %73 = vmatprep.subr.mxu0 0.0
    %74 = vmatpush2.msra.mxu0 0.0
    %75 = vmatprep.subr.mxu0 0.0
    %76 = vmatpush2.msra.mxu0 0.0
    %77 = vmatprep.subr.mxu0 0.0
    %78 = vmatpush2.msra.mxu0 0.0
    %79 = vmatprep.subr.mxu0 0.0
    %80 = vmatpush2.msra.mxu0 0.0
    %81 = vmatprep.subr.mxu0 0.0
    %82 = vmatpush2.msra.mxu0 0.0
    %83 = vmatprep.subr.mxu0 0.0
    %84 = vmatpush2.msra.mxu0 0.0
    %85 = vmatprep.subr.mxu0 0.0
    %86 = vmatpush2.msra.mxu0 0.0
    %87 = vmatprep.subr.mxu0 0.0
    %88 = vmatpush2.msra.mxu0 0.0
    %89 = vmatprep.subr.mxu0 0.0
    %90 = vmatpush2.msra.mxu0 0.0
    %91 = vmatprep.subr.mxu0 0.0
    %92 = vmatpush2.msra.mxu0 0.0
    %93 = vmatprep.subr.mxu0 0.0
    %94 = vmatpush2.msra.mxu0 0.0
    %95 = vmatprep.subr.mxu0 0.0
    %96 = vmatpush2.msra.mxu0 0.0
    %97 = vmatprep.mubr.f32.mxu0 0.0
    %98 = vmatmul.mubr.f32.gmra.mxu0 %v31
    %v99 = vpop.f32.mrf.mxu0
    %v100 = vadd.f32 %v27, %v99
    %v101 = vpop.f32.mrf.mxu0
    %102 = vdwg.mxu0
    %vm103 = vcmask 74752
    %104 = vst.msk [vmem:[#allocation2] sm:$0x3] %vm103, %v100
    // Predicated region
    $region14: #{cnn3d_forward.5} parent=1 // pred_check
      _
    $region15: #{cnn3d_forward.5} parent=1 // pred_check_branch
      %106 = sbr.rel (0) target = $region17
    $region16: #{cnn3d_forward.5} parent=1 // pred_region
      %s108 = ssub.s32 32, 32
      %109 = vsyncadd [#allocation3], %s108
      %s111 = sshll.u32 [#allocation2], 4
      %s112 = int_to_ptr.vmem [resolvable:$true] %s111
      %114 = dma.vmem_to_hbm [thread:$0]  %s112, 32, %s3, [#allocation3]
    $region17: #{cnn3d_forward.5} parent=1 // pred_fallthru
      _
    // Predicated region
    $region18: #{cnn3d_forward.5} parent=1 // pred_check
      _
    $region19: #{cnn3d_forward.5} parent=1 // pred_check_branch
      %116 = sbr.rel (0) target = $region21
    $region20: #{cnn3d_forward.5} parent=1 // pred_region
      %117 = dma.done [#allocation3], 32
    $region21: #{cnn3d_forward.5} parent=1 // pred_fallthru
      _
    %118 = vsyncpa [#allocation3], 1

</llo_original>
